<compile_context>
chip_gen: v7x
topology: tpu7x:2x2x1
jax: 0.10.0
libtpu: 0.0.40
codegen_flags: <defaults>
</compile_context>

<pallas_src>
import functools

import jax
import jax.numpy as jnp
from jax import lax
from jax.experimental import pallas as pl
from jax.experimental.pallas import tpu as pltpu


# ----------------------------------------------------------------------------
# Spectral normalization (power iteration) -- tiny parameter setup, plain JAX glue.
# Mirrors SN.W_() with num_svs=1, num_itrs=1 (gram_schmidt is a no-op for 1 sv).
# ----------------------------------------------------------------------------
def spectral_normalize(w, u, eps=1e-8):
    # w: (out, in) for a 1x1 conv, u: (1, out)
    wm = w.reshape(w.shape[0], -1)
    v = u @ wm                                            # (1, in)
    v = v / jnp.maximum(jnp.linalg.norm(v), eps)          # F.normalize
    u_new = v @ wm.T                                      # (1, out)
    u_new = u_new / jnp.maximum(jnp.linalg.norm(u_new), eps)
    sv = (v @ wm.T @ u_new.T)[0, 0]
    # TODO(synk): the in-place buffer update `u_[i][:] = u` (training mode) is
    # stateful and omitted; it does not change the forward output.
    return w / sv


# ----------------------------------------------------------------------------
# Per-chip sizing helpers.
# ----------------------------------------------------------------------------
def _vmem_capacity_bytes():
    try:
        return int(pltpu.get_tpu_info().vmem_capacity_bytes)
    except Exception:
        return 64 * 1024 * 1024          # conservative fallback (v7x per-TC)


def _vmem_limit(est_bytes, cap):
    # request ~1.5x the static estimate, floor 32 MiB, hard cap 80% of physical
    # VMEM (v7x has only 64 MiB per TensorCore -- no fixed 100 MiB ceiling).
    return int(min(max(int(1.5 * est_bytes), 32 * 1024 * 1024), int(0.8 * cap)))


def _use_bf16_exp():
    # bf16 EUP exists on v6e/v7x (~2x exp throughput); v5e and older keep f32 exp.
    try:
        kind = jax.devices()[0].device_kind.lower()
    except Exception:
        return False
    return ("v6" in kind) or ("v7" in kind)


def _pick_rows(H, W, C, vmem_cap):
    """Image rows per pre-pass grid step.

    Even divisor of H with (rh*W) % 32 == 0 (keeps the x block and the pooled
    output block (8,128)-legal), grown until the f32 x chunk reaches ~1/8 of
    VMEM (it is double-buffered), so the pre-pass never holds a full huge x.
    """
    target = max(vmem_cap // 8, 2 << 20)
    best = None
    for rh in range(2, H + 1, 2):
        if H % rh or (rh * W) % 32:
            continue
        if best is None or rh * W * C * 4 <= target:
            best = rh
        if rh * W * C * 4 > target:
            break
    return best if best is not None else H


def _pick_tq(HW, HW4, vmem_cap):
    """Query-tile size: largest divisor of HW (multiple of 8, <=1024) whose live
    (tq, HW4) f32 softmax intermediates stay under ~1/4 of the chip's VMEM."""
    budget = max(vmem_cap // 4, 4 << 20)

    def fits(t):
        return 4 * t * HW4 * 4 <= budget

    for cand in (1024, 512, 256, 128, 64, 32, 16, 8):
        if HW % cand == 0 and fits(cand):
            return cand
    best = None                             # generic divisor search (odd-shaped maps)
    for t in range(8, min(HW, 1024) + 1, 8):
        if HW % t == 0 and fits(t):
            best = t
    return best if best is not None else HW


# ----------------------------------------------------------------------------
# Pre-pass kernel: fused [g | phi] 1x1 conv + 2x2 max-pool.
# ----------------------------------------------------------------------------
def _pool_proj_kernel(x_ref, wpg_ref, pg_ref, hp_sc, *, rh, W, Cpg):
    # x_ref : (1, rh*W, C) f32, raster rows of `rh` image rows
    # wpg   : (C, Cpg)     bf16 fused [g | phi] SN'd weights
    # pg_ref: (1, rh*W//4, Cpg) bf16 pooled fused conv output
    # hp_sc : (rh//2, W, Cpg)   f32 single shared pool scratch
    y = jnp.dot(x_ref[0].astype(jnp.bfloat16), wpg_ref[...],
                preferred_element_type=jnp.float32)           # (rh*W, Cpg)
    # row pool: one wide max + one store (no unrolled per-row slice loop)
    y3 = y.reshape(rh // 2, 2 * W, Cpg)
    hp_sc[...] = jnp.maximum(y3[:, :W, :], y3[:, W:, :])      # (rh//2, W, Cpg)
    # column pool: stride-2 sublane loads
    pooled = jnp.maximum(hp_sc[:, pl.ds(0, W // 2, stride=2), :],
                         hp_sc[:, pl.ds(1, W // 2, stride=2), :])
    pg_ref[0] = pooled.reshape(rh * W // 4, Cpg).astype(pg_ref.dtype)


# ----------------------------------------------------------------------------
# Main kernel: theta 1x1 conv, softmax attention, output 1x1 conv, residual.
# ----------------------------------------------------------------------------
def _attention_kernel(gamma_ref, xq_ref, wth_ref, wo_ref, phit_ref, g_ref, o_ref,
                      *, bf16_exp):
    xq = xq_ref[0]                                             # (tq, C) f32
    theta = jnp.dot(xq.astype(jnp.bfloat16), wth_ref[...],
                    preferred_element_type=jnp.float32)        # (tq, C8)
    # scores against the lane-dense, pre-transposed pooled phi: (tq,C8)x(C8,HW4)
    s = jnp.dot(theta.astype(jnp.bfloat16), phit_ref[0],
                preferred_element_type=jnp.float32)            # (tq, HW4)
    m = jnp.max(s, axis=-1, keepdims=True)
    if bf16_exp:
        # v6e/v7x: bf16 EUP exp (~2x throughput); row-sum accumulated in f32.
        e = jnp.exp((s - m).astype(jnp.bfloat16))
        l = jnp.sum(e.astype(jnp.float32), axis=-1, keepdims=True)
    else:
        e32 = jnp.exp(s - m)
        l = jnp.sum(e32, axis=-1, keepdims=True)
        e = e32.astype(jnp.bfloat16)
    # un-normalized PV matmul; normalize the small (tq, C2) result afterwards
    # (4x fewer VPU multiplies than scaling the (tq, HW4) weights).
    # NOTE: pl.reciprocal(approx=True) deviates slightly from exact softmax but
    # stays well inside the bf16-matmul tolerance used for verification.
    attn = jnp.dot(e, g_ref[0], preferred_element_type=jnp.float32)   # (tq, C2)
    attn = attn * pl.reciprocal(l, approx=True)
    o = jnp.dot(attn.astype(jnp.bfloat16), wo_ref[...],
                preferred_element_type=jnp.float32)            # (tq, C)
    o_ref[0] = (gamma_ref[0] * o + xq).astype(o_ref.dtype)


# ----------------------------------------------------------------------------
# Wrapper.
# ----------------------------------------------------------------------------
def attention_pallas(x_nchw, w_theta, w_phi, w_g, w_o,
                     u_theta, u_phi, u_g, u_o, gamma, eps=1e-8, tq=None):
    B, C, H, W = x_nchw.shape
    assert H % 2 == 0 and W % 2 == 0, "2x2 max-pool needs even H, W"
    assert C % 8 == 0, "Attention(ch) uses ch//8 and ch//2"
    C8, C2 = C // 8, C // 2
    Cpg = C2 + C8
    HW, HW4 = H * W, (H * W) // 4

    vmem_cap = _vmem_capacity_bytes()

    # spectral-norm the conv weights (f32), transpose to (in, out), cast to bf16
    wth = spectral_normalize(w_theta, u_theta, eps).T.astype(jnp.bfloat16)  # (C, C8)
    wph = spectral_normalize(w_phi, u_phi, eps).T.astype(jnp.bfloat16)      # (C, C8)
    wg = spectral_normalize(w_g, u_g, eps).T.astype(jnp.bfloat16)           # (C, C2)
    wo = spectral_normalize(w_o, u_o, eps).T.astype(jnp.bfloat16)           # (C2, C)
    wpg = jnp.concatenate([wg, wph], axis=1)                                # (C, Cpg)

    x_flat = jnp.transpose(x_nchw, (0, 2, 3, 1)).reshape(B, HW, C)  # f32, row = h*W+w
    gamma_arr = jnp.asarray(gamma, jnp.float32).reshape(1)

    # ---- pre-pass: fused phi/g conv + 2x2 pool -> (B, HW4, Cpg) bf16 ----
    rh = _pick_rows(H, W, C, vmem_cap)
    n_r = H // rh
    rhW, rhW4 = rh * W, (rh * W) // 4

    pre_est = (2 * rhW * C * 4 + 2 * C * Cpg * 2 + 2 * rhW4 * Cpg * 2
               + (rh // 2) * W * Cpg * 4 + 3 * rhW * Cpg * 4 + (2 << 20))
    pg = pl.pallas_call(
        functools.partial(_pool_proj_kernel, rh=rh, W=W, Cpg=Cpg),
        out_shape=jax.ShapeDtypeStruct((B, HW4, Cpg), jnp.bfloat16),
        grid_spec=pltpu.PrefetchScalarGridSpec(
            num_scalar_prefetch=0,
            grid=(B, n_r),
            in_specs=[
                pl.BlockSpec((1, rhW, C), lambda b, r: (b, r, 0)),    # x row chunk
                pl.BlockSpec((C, Cpg), lambda b, r: (0, 0)),          # fused [g|phi] W
            ],
            out_specs=pl.BlockSpec((1, rhW4, Cpg), lambda b, r: (b, r, 0)),
            scratch_shapes=[pltpu.VMEM((rh // 2, W, Cpg), jnp.float32)],
        ),
        compiler_params=pltpu.CompilerParams(
            dimension_semantics=("parallel", "parallel"),
            vmem_limit_bytes=_vmem_limit(pre_est, vmem_cap)),
    )(x_flat, wpg)

    # tiny host-side split/transpose of the pooled projections (negligible HBM):
    # g stays (B, HW4, C2); phi is presented lane-dense / pre-transposed.
    g_p = pg[:, :, :C2]                                   # (B, HW4, C2) bf16
    phi_t = jnp.swapaxes(pg[:, :, C2:], 1, 2)             # (B, C8, HW4) bf16

    # ---- main pass: per-query-tile attention (no full-x residency, no q carry) ----
    if tq is None:
        tq = _pick_tq(HW, HW4, vmem_cap)
    assert HW % tq == 0 and (tq % 8 == 0 or tq == HW)
    n_q = HW // tq

    main_est = (4 * tq * C * 4                      # x tile + out tile (double-buffered)
                + 2 * (C * C8 + C2 * C) * 2         # weights
                + 2 * (C8 * HW4 + HW4 * C2) * 2     # pooled phi^T / g
                + 5 * tq * HW4 * 4                  # live softmax intermediates
                + 4 * tq * (C2 + C8) * 4
                + (2 << 20))

    out_flat = pl.pallas_call(
        functools.partial(_attention_kernel, bf16_exp=_use_bf16_exp()),
        out_shape=jax.ShapeDtypeStruct((B, HW, C), x_nchw.dtype),
        grid_spec=pltpu.PrefetchScalarGridSpec(
            num_scalar_prefetch=0,
            grid=(B, n_q),
            in_specs=[
                pl.BlockSpec(memory_space=pltpu.MemorySpace.SMEM),     # gamma scalar
                pl.BlockSpec((1, tq, C), lambda b, q: (b, q, 0)),      # x query tile
                pl.BlockSpec((C, C8), lambda b, q: (0, 0)),            # W_theta^T
                pl.BlockSpec((C2, C), lambda b, q: (0, 0)),            # W_o^T
                pl.BlockSpec((1, C8, HW4), lambda b, q: (b, 0, 0)),    # pooled phi^T
                pl.BlockSpec((1, HW4, C2), lambda b, q: (b, 0, 0)),    # pooled g
            ],
            out_specs=pl.BlockSpec((1, tq, C), lambda b, q: (b, q, 0)),
        ),
        compiler_params=pltpu.CompilerParams(
            dimension_semantics=("parallel", "parallel"),   # both axes megacore-shardable
            vmem_limit_bytes=_vmem_limit(main_est, vmem_cap)),
    )(gamma_arr, x_flat, wth, wo, phi_t, g_p)

    # TODO(synk): optional further win -- fuse this NHWC->NCHW transpose into the
    # kernel with a per-tile (tq,C)->(C,tq) XLU transpose and a (B,C,HW) out layout.
    return out_flat.reshape(B, H, W, C).transpose(0, 3, 1, 2)   # back to NCHW


# ----------------------------------------------------------------------------
# Pure-JAX reference mirroring the PyTorch forward (f32, HIGHEST) for verification.
# ----------------------------------------------------------------------------
def reference_forward(x, w_theta, w_phi, w_g, w_o,
                      u_theta, u_phi, u_g, u_o, gamma, eps=1e-8):
    B, C, H, W = x.shape

    def conv1x1(t, w):
        return jnp.einsum('bchw,oc->bohw', t, w, precision=lax.Precision.HIGHEST)

    def pool2x2(t):
        b, c, h, w = t.shape
        return t.reshape(b, c, h // 2, 2, w // 2, 2).max(axis=(3, 5))

    theta = conv1x1(x, spectral_normalize(w_theta, u_theta, eps))
    phi = pool2x2(conv1x1(x, spectral_normalize(w_phi, u_phi, eps)))
    g = pool2x2(conv1x1(x, spectral_normalize(w_g, u_g, eps)))

    theta = theta.reshape(B, C // 8, H * W)
    phi = phi.reshape(B, C // 8, H * W // 4)
    g = g.reshape(B, C // 2, H * W // 4)

    s = jnp.einsum('bci,bcj->bij', theta, phi, precision=lax.Precision.HIGHEST)
    beta = jax.nn.softmax(s, axis=-1)
    o_pre = jnp.einsum('bcj,bij->bci', g, beta, precision=lax.Precision.HIGHEST)
    o_pre = o_pre.reshape(B, C // 2, H, W)
    o = conv1x1(o_pre, spectral_normalize(w_o, u_o, eps))
    return gamma * o + x


if __name__ == "__main__":
    B, C, H, W = 2, 32, 16, 16
    C8, C2 = C // 8, C // 2

    key = jax.random.PRNGKey(0)
    ks = jax.random.split(key, 9)
    # conv weights (out, in) for 1x1 convs; u buffers (1, out) as in SN.__init__
    w_theta = jax.random.normal(ks[0], (C8, C), jnp.float32) * 0.2
    w_phi = jax.random.normal(ks[1], (C8, C), jnp.float32) * 0.2
    w_g = jax.random.normal(ks[2], (C2, C), jnp.float32) * 0.2
    w_o = jax.random.normal(ks[3], (C, C2), jnp.float32) * 0.2
    u_theta = jax.random.normal(ks[4], (1, C8), jnp.float32)
    u_phi = jax.random.normal(ks[5], (1, C8), jnp.float32)
    u_g = jax.random.normal(ks[6], (1, C2), jnp.float32)
    u_o = jax.random.normal(ks[7], (1, C), jnp.float32)
    x = jax.random.normal(ks[8], (B, C, H, W), jnp.float32)
    # module inits gamma to 0.0; use a nonzero deterministic value so the
    # attention path is actually exercised by the check below.
    gamma = jnp.float32(0.5)

    # tq=128 -> 2 query tiles per batch, exercising the multi-tile grid path.
    out = attention_pallas(x, w_theta, w_phi, w_g, w_o,
                           u_theta, u_phi, u_g, u_o, gamma, tq=128)
    out = jax.block_until_ready(out)
    assert out.shape == (B, C, H, W)

    ref = reference_forward(x, w_theta, w_phi, w_g, w_o,
                            u_theta, u_phi, u_g, u_o, gamma)
    max_err = float(jnp.max(jnp.abs(out - ref)))
    # bf16 matmul operands (f32 accumulation, exact f32 residual, approx
    # reciprocal, bf16 exp on v6e/v7x) vs f32-HIGHEST reference: tolerance
    # relaxed accordingly; real bugs show up as O(0.1+) errors.
    if not bool(jnp.allclose(out, ref, atol=3e-2, rtol=3e-2)):
        raise AssertionError(f"Pallas/reference mismatch, max abs err = {max_err}")
    print("KERNEL_OK")
</pallas_src>

<mosaic_0001>
module attributes {stable_mosaic.version = 11 : i64} {
  func.func @_pool_proj_kernel(%arg0: i32, %arg1: i32, %arg2: memref<1x256x32xf32, #tpu.memory_space<vmem>>, %arg3: memref<32x20xbf16, #tpu.memory_space<vmem>>, %arg4: memref<1x64x20xbf16, #tpu.memory_space<vmem>>, %arg5: memref<8x16x20xf32, #tpu.memory_space<vmem>>) attributes {dimension_semantics = [#tpu.dimension_semantics<parallel>, #tpu.dimension_semantics<parallel>], iteration_bounds = array<i64: 2, 1>, scalar_prefetch = 0 : i64, scratch_operands = 1 : i64, tpu.core_type = #tpu.core_type<tc>, window_params = [{transform_indices = @transform_0, window_bounds = array<i64: 1, 256, 32>}, {pipeline_mode = #tpu.pipeline_mode<synchronous>, transform_indices = @transform_1, window_bounds = array<i64: 32, 20>}, {transform_indices = @transform_2, window_bounds = array<i64: 1, 64, 20>}]} {
    %c0 = arith.constant 0 : index
    %c0_0 = arith.constant 0 : index
    %c0_1 = arith.constant 0 : index
    %0 = vector.load %arg2[%c0, %c0_0, %c0_1] : memref<1x256x32xf32, #tpu.memory_space<vmem>>, vector<1x256x32xf32>
    %1 = vector.shape_cast %0 : vector<1x256x32xf32> to vector<256x32xf32>
    %2 = arith.truncf %1 : vector<256x32xf32> to vector<256x32xbf16>
    %c0_2 = arith.constant 0 : index
    %c0_3 = arith.constant 0 : index
    %3 = vector.load %arg3[%c0_2, %c0_3] : memref<32x20xbf16, #tpu.memory_space<vmem>>, vector<32x20xbf16>
    %cst = arith.constant dense<0.000000e+00> : vector<256x20xf32>
    %4 = tpu.matmul %2, %3, %cst {dimension_numbers = #tpu.dot_dimension_numbers<[1], [0], [0], [1], [0, 0, 1, 1], [], []>} : vector<256x32xbf16>, vector<32x20xbf16>, vector<256x20xf32> -> vector<256x20xf32>
    %5 = vector.shape_cast %4 : vector<256x20xf32> to vector<8x32x20xf32>
    %6 = vector.extract_strided_slice %5 {offsets = [0, 0, 0], sizes = [8, 16, 20], strides = [1, 1, 1]} : vector<8x32x20xf32> to vector<8x16x20xf32>
    %7 = vector.extract_strided_slice %5 {offsets = [0, 16, 0], sizes = [8, 16, 20], strides = [1, 1, 1]} : vector<8x32x20xf32> to vector<8x16x20xf32>
    %8 = arith.maximumf %6, %7 : vector<8x16x20xf32>
    %c0_4 = arith.constant 0 : index
    %c0_5 = arith.constant 0 : index
    %c0_6 = arith.constant 0 : index
    %9 = vector.load %arg5[%c0_4, %c0_5, %c0_6] : memref<8x16x20xf32, #tpu.memory_space<vmem>>, vector<8x16x20xf32>
    tpu.vector_store %arg5[%c0_4, %c0_5, %c0_6], %8 {strides = array<i32>} : memref<8x16x20xf32, #tpu.memory_space<vmem>>, vector<8x16x20xf32>,
    %c0_7 = arith.constant 0 : index
    %c0_8 = arith.constant 0 : index
    %c0_9 = arith.constant 0 : index
    %10 = tpu.strided_load %arg5[%c0_7, %c0_8, %c0_9] {strides = array<i32: 1, 2, 1>} : memref<8x16x20xf32, #tpu.memory_space<vmem>>, vector<8x8x20xf32>
    %c0_10 = arith.constant 0 : index
    %c1 = arith.constant 1 : index
    %c0_11 = arith.constant 0 : index
    %11 = tpu.strided_load %arg5[%c0_10, %c1, %c0_11] {strides = array<i32: 1, 2, 1>} : memref<8x16x20xf32, #tpu.memory_space<vmem>>, vector<8x8x20xf32>
    %12 = arith.maximumf %10, %11 : vector<8x8x20xf32>
    %13 = vector.shape_cast %12 : vector<8x8x20xf32> to vector<64x20xf32>
    %14 = arith.truncf %13 : vector<64x20xf32> to vector<64x20xbf16>
    %c0_12 = arith.constant 0 : index
    %c0_13 = arith.constant 0 : index
    %c0_14 = arith.constant 0 : index
    %15 = vector.load %arg4[%c0_12, %c0_13, %c0_14] : memref<1x64x20xbf16, #tpu.memory_space<vmem>>, vector<1x64x20xbf16>
    %16 = vector.shape_cast %15 : vector<1x64x20xbf16> to vector<64x20xbf16>
    %17 = vector.shape_cast %14 : vector<64x20xbf16> to vector<1x64x20xbf16>
    tpu.vector_store %arg4[%c0_12, %c0_13, %c0_14], %17 {strides = array<i32>} : memref<1x64x20xbf16, #tpu.memory_space<vmem>>, vector<1x64x20xbf16>,
    return
  }
  func.func @transform_0(%arg0: i32, %arg1: i32) -> (i32, i32, i32) {
    %c0_i32 = arith.constant 0 : i32
    %c0_i32_0 = arith.constant 0 : i32
    return %arg0, %arg1, %c0_i32 : i32, i32, i32
  }
  func.func @transform_1(%arg0: i32, %arg1: i32) -> (i32, i32) {
    %c0_i32 = arith.constant 0 : i32
    %c0_i32_0 = arith.constant 0 : i32
    %c0_i32_1 = arith.constant 0 : i32
    return %c0_i32, %c0_i32_0 : i32, i32
  }
  func.func @transform_2(%arg0: i32, %arg1: i32) -> (i32, i32, i32) {
    %c0_i32 = arith.constant 0 : i32
    %c0_i32_0 = arith.constant 0 : i32
    return %arg0, %arg1, %c0_i32 : i32, i32, i32
  }
}

</mosaic_0001>

<llo_original>
// kernel: tpu_custom_call.1
$region0: #{tpu_custom_call.1}
  #allocation0 [shape = 'u32[]', space=smem, size = 0x4, offset = 0x4, fixed_abs, tag = 'smem constant byte address 0x4 - core index']
  #allocation1 [shape = 'u32[144,128]{1,0:T(1,128)}', space=vmem, size = 0x12000, scoped, tag = 'internal scratch']
  #allocation2 [shape = 'f32[8,16,20]{2,1,0:T(8,128)}', space=vmem, size = 0x10000, scoped, tag = 'scratch operand']
  %s0 = inlined_call_operand.vmem [shape: f32[2,256,32], index: 0, kind: input, shape index: {}]
  %s1 = inlined_call_operand.vmem [shape: bf16[32,20], index: 1, kind: input, shape index: {}]
  %s2 = inlined_call_operand.vmem [shape: bf16[2,64,20], index: 2, kind: output, shape index: {}]
  %s3 = sld [smem:[#allocation0]]
  $region41: #{tpu_custom_call.1} parent=0
    _
  %s5 = ssub.s32 1, %s3
  %s6 = scalar_select 0, %s5, %s3
  loop: start=0, step=1, limit=4
  $region2: #{tpu_custom_call.1} parent=0 // loop_pre_header
    _
  $region3: #{tpu_custom_call.1} parent=0 // loop_header
    %s8 = sphi 0, %s12
    %p9 = scmp.ge.s32.totalorder %s8, 4
    %s15 = sphi 0, %s27
    %s16 = sphi 0, %s23
    %s17 = sphi 0, %s15
    %s18 = sphi 0, %s16
    %s19 = sphi 0, %s17
    %s20 = sphi 0, %s18
    %s32 = sphi 0, %s34
    %s35 = sphi 0, %s32
    %s36 = sphi 0, %s35
    %s52 = sphi 0, %s36
    %s56 = sphi 0, %s56
    %s58 = sphi 0, %s56
    %s59 = sphi 0, %s58
    %s73 = sphi 0, %s59
    %s81 = sphi 0, %s83
    %s84 = sphi 0, %s81
    %s85 = sphi 0, %s84
    %s101 = sphi 0, %s85
  $region4: #{tpu_custom_call.1} parent=0 // loop_header_branch
    %11 = sbr.rel (%p9) target = $region8
  $region5: #{tpu_custom_call.1} parent=0 // loop_body
    %s13 = ssub.s32 %s8, 1
    %s14 = ssub.s32 %s8, 2
    %s21 = sadd.s32 1, %s16
    %p22 = scmp.ge.s32.totalorder %s21, 1
    %s23 = scalar_select %p22, 0, %s21
    %s24 = sadd.s32 1, %s15
    %s25 = scalar_select %p22, %s24, %s15
    %p26 = scmp.ge.s32.totalorder %s25, 2
    %s27 = scalar_select %p26, 0, %s25
    %s28 = ssub.s32 %s15, %s27
    %s29 = ssub.s32 %s16, %s23
    %s30 = sor.u32 %s28, %s29
    %p31 = scmp.eq.s32.totalorder %s30, 0
    %s33 = sadd.s32 %s32, 1
    %s34 = scalar_select %p31, %s32, %s33
    %p37 = pneg %p31
    %p38 = scmp.eq.s32.totalorder %s8, 1
    %p39 = por %p37, %p38
    %p40 = scmp.ne.s32.totalorder %s32, %s35
    %p41 = scmp.eq.s32.totalorder %s8, 0
    %p42 = por %p40, %p41
    %p43 = scmp.ne.s32.totalorder %s32, %s35
    %p44 = scmp.eq.s32.totalorder %s13, 1
    %p45 = por %p43, %p44
    %p46 = scmp.ne.s32.totalorder %s35, %s36
    %p47 = scmp.eq.s32.totalorder %s13, 0
    %p48 = por %p46, %p47
    %p49 = scmp.ne.s32.totalorder %s35, %s36
    %p50 = scmp.eq.s32.totalorder %s14, 1
    %p51 = por %p49, %p50
    %p53 = scmp.ne.s32.totalorder %s36, %s52
    %p54 = scmp.eq.s32.totalorder %s14, 0
    %p55 = por %p53, %p54
    %s57 = sadd.s32 %s56, 1
    %p60 = scmp.eq.s32.totalorder %s8, 1
    %p61 = scmp.ne.s32.totalorder %s56, %s58
    %p62 = scmp.eq.s32.totalorder %s8, 0
    %p63 = por %p61, %p62
    %p64 = scmp.ne.s32.totalorder %s56, %s58
    %p65 = scmp.eq.s32.totalorder %s13, 1
    %p66 = por %p64, %p65
    %p67 = scmp.ne.s32.totalorder %s58, %s59
    %p68 = scmp.eq.s32.totalorder %s13, 0
    %p69 = por %p67, %p68
    %p70 = scmp.ne.s32.totalorder %s58, %s59
    %p71 = scmp.eq.s32.totalorder %s14, 1
    %p72 = por %p70, %p71
    %p74 = scmp.ne.s32.totalorder %s59, %s73
    %p75 = scmp.eq.s32.totalorder %s14, 0
    %p76 = por %p74, %p75
    %s77 = ssub.s32 %s15, %s27
    %s78 = ssub.s32 %s16, %s23
    %s79 = sor.u32 %s77, %s78
    %p80 = scmp.eq.s32.totalorder %s79, 0
    %s82 = sadd.s32 %s81, 1
    %s83 = scalar_select %p80, %s81, %s82
    %p86 = pneg %p80
    %p87 = scmp.eq.s32.totalorder %s8, 1
    %p88 = por %p86, %p87
    %p89 = scmp.ne.s32.totalorder %s81, %s84
    %p90 = scmp.eq.s32.totalorder %s8, 0
    %p91 = por %p89, %p90
    %p92 = scmp.ne.s32.totalorder %s81, %s84
    %p93 = scmp.eq.s32.totalorder %s13, 1
    %p94 = por %p92, %p93
    %p95 = scmp.ne.s32.totalorder %s84, %s85
    %p96 = scmp.eq.s32.totalorder %s13, 0
    %p97 = por %p95, %p96
    %p98 = scmp.ne.s32.totalorder %s84, %s85
    %p99 = scmp.eq.s32.totalorder %s14, 1
    %p100 = por %p98, %p99
    %p102 = scmp.ne.s32.totalorder %s85, %s101
    %p103 = scmp.eq.s32.totalorder %s14, 0
    %p104 = por %p102, %p103
    %p105 = scmp.le.s32.totalorder 1, %s8
    %p106 = scmp.lt.s32.totalorder %s8, 3
    %p107 = pnand %p105, %p106
    %p108 = pneg %p107
    // Predicated region
    $region9: #{tpu_custom_call.1} parent=5 // pred_check
      _
    $region10: #{tpu_custom_call.1} parent=5 // pred_check_branch
      %110 = sbr.rel (%p107) target = $region12
    $region11: #{tpu_custom_call.1} parent=5 // pred_region
      %s111 = ssub.s32 %s8, 1
      // Predicated region
      $region13: #{tpu_custom_call.1} parent=11 // pred_check
        %p112 = pneg %p69
      $region14: #{tpu_custom_call.1} parent=11 // pred_check_branch
        %114 = sbr.rel (%p112) target = $region16
      $region15: #{tpu_custom_call.1} parent=11 // pred_region
        _
      $region16: #{tpu_custom_call.1} parent=11 // pred_fallthru
        _
    $region12: #{tpu_custom_call.1} parent=5 // pred_fallthru
      _
    %p115 = scmp.lt.s32.totalorder %s8, 2
    // Predicated region
    $region17: #{tpu_custom_call.1} parent=5 // pred_check
      %p116 = pneg %p115
    $region18: #{tpu_custom_call.1} parent=5 // pred_check_branch
      %118 = sbr.rel (%p116) target = $region20
    $region19: #{tpu_custom_call.1} parent=5 // pred_region
      // Predicated region
      $region21: #{tpu_custom_call.1} parent=19 // pred_check
        %p119 = pneg %p42
      $region22: #{tpu_custom_call.1} parent=19 // pred_check_branch
        %121 = sbr.rel (%p119) target = $region24
      $region23: #{tpu_custom_call.1} parent=19 // pred_region
        %s122 = smul.u32 32, %s16
        %p123 = scmp.lt.s32.totalorder %s15, 1
        %s124 = scalar_select %p123, %s15, 1
        %p125 = scmp.lt.s32.totalorder %s122, 31
        %s126 = scalar_select %p125, %s122, 31
        %s127 = smul.addr %s124, 32
        %s128 = sadd.s32 %s126, %s127
        %s129 = smul.addr %s128, 8
        %s130 = scalar_lea.vmem %s0, %s129
        %s131 = smul.u32 32, %s16
      $region24: #{tpu_custom_call.1} parent=19 // pred_fallthru
        _
    $region20: #{tpu_custom_call.1} parent=5 // pred_fallthru
      _
    %p132 = scmp.le.s32.totalorder 1, %s8
    %p133 = scmp.lt.s32.totalorder %s8, 3
    %p134 = pnand %p132, %p133
    %p135 = pneg %p134
    // Predicated region
    $region25: #{tpu_custom_call.1} parent=5 // pred_check
      _
    $region26: #{tpu_custom_call.1} parent=5 // pred_check_branch
      %137 = sbr.rel (%p134) target = $region28
    $region27: #{tpu_custom_call.1} parent=5 // pred_region
      %s138 = ssub.s32 %s8, 1
      %s139 = smul.u32 32, %s18
      %p140 = scmp.lt.s32.totalorder %s17, 1
      %s141 = scalar_select %p140, %s17, 1
      %p142 = scmp.lt.s32.totalorder %s139, 31
      %s143 = scalar_select %p142, %s139, 31
      %s144 = smul.addr %s141, 32
      %s145 = sadd.s32 %s143, %s144
      %s146 = smul.addr %s145, 8
      %s147 = scalar_lea.vmem %s0, %s146
      %p148 = pneg %p48
      %p149 = pneg %p45
      %p150 = pneg %p69
      %p151 = pneg %p66
      %p152 = pneg %p97
      %p153 = pneg %p94
      %s154 = smul.u32 8, %s18
      %p155 = scmp.lt.s32.totalorder %s17, 1
      %s156 = scalar_select %p155, %s17, 1
      %p157 = scmp.lt.s32.totalorder %s154, 7
      %s158 = scalar_select %p157, %s154, 7
      %s159 = smul.addr %s156, 8
      %s160 = sadd.s32 %s158, %s159
      %s161 = smul.addr %s160, 4
      %s162 = scalar_lea.vmem %s2, %s161
      %s163 = smul.u32 32, %s18
      %p164 = scmp.lt.s32.totalorder %s17, 1
      %s165 = scalar_select %p164, %s17, 1
      %p166 = scmp.lt.s32.totalorder %s163, 31
      %s167 = scalar_select %p166, %s163, 31
      %s168 = smul.addr %s165, 32
      %s169 = sadd.s32 %s167, %s168
      %s170 = smul.addr %s169, 8
      %s171 = scalar_lea.vmem %s0, %s170
      %s172 = smul.u32 32, %s18
      %s173 = smul.u32 8, %s18
      %p174 = scmp.lt.s32.totalorder %s17, 1
      %s175 = scalar_select %p174, %s17, 1
      %p176 = scmp.lt.s32.totalorder %s173, 7
      %s177 = scalar_select %p176, %s173, 7
      %s178 = smul.addr %s175, 8
      %s179 = sadd.s32 %s177, %s178
      %s180 = smul.addr %s179, 4
      %s181 = scalar_lea.vmem %s2, %s180
      %s182 = smul.u32 8, %s18
      %v184 = vld [vmem:[%s171] sm:$0xff]
      %v185 = vld [vmem:[%s171 + $0x8] sm:$0xff]
      %v186 = vld [vmem:[%s171 + $0x10] sm:$0xff]
      %v187 = vld [vmem:[%s171 + $0x18] sm:$0xff]
      %v188 = vld [vmem:[%s171 + $0x20] sm:$0xff]
      %v189 = vld [vmem:[%s171 + $0x28] sm:$0xff]
      %v190 = vld [vmem:[%s171 + $0x30] sm:$0xff]
      %v191 = vld [vmem:[%s171 + $0x38] sm:$0xff]
      %v192 = vld [vmem:[%s171 + $0x40] sm:$0xff]
      %v193 = vld [vmem:[%s171 + $0x48] sm:$0xff]
      %v194 = vld [vmem:[%s171 + $0x50] sm:$0xff]
      %v195 = vld [vmem:[%s171 + $0x58] sm:$0xff]
      %v196 = vld [vmem:[%s171 + $0x60] sm:$0xff]
      %v197 = vld [vmem:[%s171 + $0x68] sm:$0xff]
      %v198 = vld [vmem:[%s171 + $0x70] sm:$0xff]
      %v199 = vld [vmem:[%s171 + $0x78] sm:$0xff]
      %v200 = vld [vmem:[%s171 + $0x80] sm:$0xff]
      %v201 = vld [vmem:[%s171 + $0x88] sm:$0xff]
      %v202 = vld [vmem:[%s171 + $0x90] sm:$0xff]
      %v203 = vld [vmem:[%s171 + $0x98] sm:$0xff]
      %v204 = vld [vmem:[%s171 + $0xa0] sm:$0xff]
      %v205 = vld [vmem:[%s171 + $0xa8] sm:$0xff]
      %v206 = vld [vmem:[%s171 + $0xb0] sm:$0xff]
      %v207 = vld [vmem:[%s171 + $0xb8] sm:$0xff]
      %v208 = vld [vmem:[%s171 + $0xc0] sm:$0xff]
      %v209 = vld [vmem:[%s171 + $0xc8] sm:$0xff]
      %v210 = vld [vmem:[%s171 + $0xd0] sm:$0xff]
      %v211 = vld [vmem:[%s171 + $0xd8] sm:$0xff]
      %v212 = vld [vmem:[%s171 + $0xe0] sm:$0xff]
      %v213 = vld [vmem:[%s171 + $0xe8] sm:$0xff]
      %v214 = vld [vmem:[%s171 + $0xf0] sm:$0xff]
      %v215 = vld [vmem:[%s171 + $0xf8] sm:$0xff]
      %v216 = vpack.c.bf16 %v185, %v184
      %v217 = vpack.c.bf16 %v187, %v186
      %v218 = vpack.c.bf16 %v189, %v188
      %v219 = vpack.c.bf16 %v191, %v190
      %v220 = vpack.c.bf16 %v193, %v192
      %v221 = vpack.c.bf16 %v195, %v194
      %v222 = vpack.c.bf16 %v197, %v196
      %v223 = vpack.c.bf16 %v199, %v198
      %v224 = vpack.c.bf16 %v201, %v200
      %v225 = vpack.c.bf16 %v203, %v202
      %v226 = vpack.c.bf16 %v205, %v204
      %v227 = vpack.c.bf16 %v207, %v206
      %v228 = vpack.c.bf16 %v209, %v208
      %v229 = vpack.c.bf16 %v211, %v210
      %v230 = vpack.c.bf16 %v213, %v212
      %v231 = vpack.c.bf16 %v215, %v214
      %v232 = vld [vmem:[%s1] sm:$0xf]
      %v233 = vld [vmem:[%s1 + $0x4] sm:$0xf]
      %v234 = vld [vmem:[%s1 + $0x8] sm:$0xf]
      %v235 = vld [vmem:[%s1 + $0xc] sm:$0xf]
      %v240 = vunpack.c.l.b16 %v232
      %v241 = vunpack.c.l.b16 %v233
      %v242 = vunpack.c.l.b16 %v234
      %v243 = vunpack.c.l.b16 %v235
      %v244 = vpack.c.b16 %v241, %v240
      %v245 = vpack.c.b16 %v243, %v242
      %vm248 = vcmask 261120
      %v250 = vsel %vm248, %v216, 0
      %v253 = vsel %vm248, %v217, 0
      %v256 = vsel %vm248, %v218, 0
      %v259 = vsel %vm248, %v219, 0
      %v262 = vsel %vm248, %v220, 0
      %v265 = vsel %vm248, %v221, 0
      %v268 = vsel %vm248, %v222, 0
      %v271 = vsel %vm248, %v223, 0
      %v274 = vsel %vm248, %v224, 0
      %v277 = vsel %vm248, %v225, 0
      %v280 = vsel %vm248, %v226, 0
      %v283 = vsel %vm248, %v227, 0
      %v286 = vsel %vm248, %v228, 0
      %v289 = vsel %vm248, %v229, 0
      %v292 = vsel %vm248, %v230, 0
      %v295 = vsel %vm248, %v231, 0
      %297 = vmatprep.subr.bf16.mxu0 0
      %298 = vmatpush1.bf16.msra.mxu0 %v244
      %299 = vmatprep.subr.bf16.mxu0 0
      %300 = vmatpush1.bf16.msra.mxu0 %v245
      %301 = vmatprep.subr.bf16.mxu0 0
      %302 = vmatpush1.bf16.msra.mxu0 0
      %303 = vmatprep.subr.bf16.mxu0 0
      %304 = vmatpush1.bf16.msra.mxu0 0
      %305 = vmatprep.subr.bf16.mxu0 0
      %306 = vmatpush1.bf16.msra.mxu0 0
      %307 = vmatprep.subr.bf16.mxu0 0
      %308 = vmatpush1.bf16.msra.mxu0 0
      %309 = vmatprep.subr.bf16.mxu0 0
      %310 = vmatpush1.bf16.msra.mxu0 0
      %311 = vmatprep.subr.bf16.mxu0 0
      %312 = vmatpush1.bf16.msra.mxu0 0
      %313 = vmatprep.subr.bf16.mxu0 0
      %314 = vmatpush1.bf16.msra.mxu0 0
      %315 = vmatprep.subr.bf16.mxu0 0
      %316 = vmatpush1.bf16.msra.mxu0 0
      %317 = vmatprep.subr.bf16.mxu0 0
      %318 = vmatpush1.bf16.msra.mxu0 0
      %319 = vmatprep.subr.bf16.mxu0 0
      %320 = vmatpush1.bf16.msra.mxu0 0
      %321 = vmatprep.subr.bf16.mxu0 0
      %322 = vmatpush1.bf16.msra.mxu0 0
      %323 = vmatprep.subr.bf16.mxu0 0
      %324 = vmatpush1.bf16.msra.mxu0 0
      %325 = vmatprep.subr.bf16.mxu0 0
      %326 = vmatpush1.bf16.msra.mxu0 0
      %327 = vmatprep.subr.bf16.mxu0 0
      %328 = vmatpush1.bf16.msra.mxu0 0
      %329 = vmatprep.mubr.bf16.mxu0 0
      %330 = vmatmul.mubr.bf16.gmra.mrb[0].mxu0 %v250
      %v331 = vpop.f32.mrb[0].mxu0
      %v332 = vadd.f32 0.0, %v331
      %v333 = vpop.f32.mrb[0].mxu0
      %v334 = vpop.f32.mrb[0].mxu0
      %v335 = vadd.f32 0.0, %v334
      %v336 = vpop.f32.mrb[0].mxu0
      %337 = vmatprep.mubr.bf16.mxu0 0
      %338 = vmatmul.mubr.bf16.gmra.mrb[0].mxu0 %v253
      %v339 = vpop.f32.mrb[0].mxu0
      %v340 = vadd.f32 0.0, %v339
      %v341 = vpop.f32.mrb[0].mxu0
      %v342 = vpop.f32.mrb[0].mxu0
      %v343 = vadd.f32 0.0, %v342
      %v344 = vpop.f32.mrb[0].mxu0
      %345 = vmatprep.mubr.bf16.mxu0 0
      %346 = vmatmul.mubr.bf16.gmra.mrb[0].mxu0 %v256
      %v347 = vpop.f32.mrb[0].mxu0
      %v348 = vadd.f32 0.0, %v347
      %v349 = vpop.f32.mrb[0].mxu0
      %v350 = vpop.f32.mrb[0].mxu0
      %v351 = vadd.f32 0.0, %v350
      %v352 = vpop.f32.mrb[0].mxu0
      %353 = vmatprep.mubr.bf16.mxu0 0
      %354 = vmatmul.mubr.bf16.gmra.mrb[0].mxu0 %v259
      %v355 = vpop.f32.mrb[0].mxu0
      %v356 = vadd.f32 0.0, %v355
      %v357 = vpop.f32.mrb[0].mxu0
      %v358 = vpop.f32.mrb[0].mxu0
      %v359 = vadd.f32 0.0, %v358
      %v360 = vpop.f32.mrb[0].mxu0
      %361 = vmatprep.mubr.bf16.mxu0 0
      %362 = vmatmul.mubr.bf16.gmra.mrb[0].mxu0 %v262
      %v363 = vpop.f32.mrb[0].mxu0
      %v364 = vadd.f32 0.0, %v363
      %v365 = vpop.f32.mrb[0].mxu0
      %v366 = vpop.f32.mrb[0].mxu0
      %v367 = vadd.f32 0.0, %v366
      %v368 = vpop.f32.mrb[0].mxu0
      %369 = vmatprep.mubr.bf16.mxu0 0
      %370 = vmatmul.mubr.bf16.gmra.mrb[0].mxu0 %v265
      %v371 = vpop.f32.mrb[0].mxu0
      %v372 = vadd.f32 0.0, %v371
      %v373 = vpop.f32.mrb[0].mxu0
      %v374 = vpop.f32.mrb[0].mxu0
      %v375 = vadd.f32 0.0, %v374
      %v376 = vpop.f32.mrb[0].mxu0
      %377 = vmatprep.mubr.bf16.mxu0 0
      %378 = vmatmul.mubr.bf16.gmra.mrb[0].mxu0 %v268
      %v379 = vpop.f32.mrb[0].mxu0
      %v380 = vadd.f32 0.0, %v379
      %v381 = vpop.f32.mrb[0].mxu0
      %v382 = vpop.f32.mrb[0].mxu0
      %v383 = vadd.f32 0.0, %v382
      %v384 = vpop.f32.mrb[0].mxu0
      %385 = vmatprep.mubr.bf16.mxu0 0
      %386 = vmatmul.mubr.bf16.gmra.mrb[0].mxu0 %v271
      %v387 = vpop.f32.mrb[0].mxu0
      %v388 = vadd.f32 0.0, %v387
      %v389 = vpop.f32.mrb[0].mxu0
      %v390 = vpop.f32.mrb[0].mxu0
      %v391 = vadd.f32 0.0, %v390
      %v392 = vpop.f32.mrb[0].mxu0
      %393 = vmatprep.mubr.bf16.mxu0 0
      %394 = vmatmul.mubr.bf16.gmra.mrb[0].mxu0 %v274
      %v395 = vpop.f32.mrb[0].mxu0
      %v396 = vadd.f32 0.0, %v395
      %v397 = vpop.f32.mrb[0].mxu0
      %v398 = vpop.f32.mrb[0].mxu0
      %v399 = vadd.f32 0.0, %v398
      %v400 = vpop.f32.mrb[0].mxu0
      %401 = vmatprep.mubr.bf16.mxu0 0
      %402 = vmatmul.mubr.bf16.gmra.mrb[0].mxu0 %v277
      %v403 = vpop.f32.mrb[0].mxu0
      %v404 = vadd.f32 0.0, %v403
      %v405 = vpop.f32.mrb[0].mxu0
      %v406 = vpop.f32.mrb[0].mxu0
      %v407 = vadd.f32 0.0, %v406
      %v408 = vpop.f32.mrb[0].mxu0
      %409 = vmatprep.mubr.bf16.mxu0 0
      %410 = vmatmul.mubr.bf16.gmra.mrb[0].mxu0 %v280
      %v411 = vpop.f32.mrb[0].mxu0
      %v412 = vadd.f32 0.0, %v411
      %v413 = vpop.f32.mrb[0].mxu0
      %v414 = vpop.f32.mrb[0].mxu0
      %v415 = vadd.f32 0.0, %v414
      %v416 = vpop.f32.mrb[0].mxu0
      %417 = vmatprep.mubr.bf16.mxu0 0
      %418 = vmatmul.mubr.bf16.gmra.mrb[0].mxu0 %v283
      %v419 = vpop.f32.mrb[0].mxu0
      %v420 = vadd.f32 0.0, %v419
      %v421 = vpop.f32.mrb[0].mxu0
      %v422 = vpop.f32.mrb[0].mxu0
      %v423 = vadd.f32 0.0, %v422
      %v424 = vpop.f32.mrb[0].mxu0
      %425 = vmatprep.mubr.bf16.mxu0 0
      %426 = vmatmul.mubr.bf16.gmra.mrb[0].mxu0 %v286
      %v427 = vpop.f32.mrb[0].mxu0
      %v428 = vadd.f32 0.0, %v427
      %v429 = vpop.f32.mrb[0].mxu0
      %v430 = vpop.f32.mrb[0].mxu0
      %v431 = vadd.f32 0.0, %v430
      %v432 = vpop.f32.mrb[0].mxu0
      %433 = vmatprep.mubr.bf16.mxu0 0
      %434 = vmatmul.mubr.bf16.gmra.mrb[0].mxu0 %v289
      %v435 = vpop.f32.mrb[0].mxu0
      %v436 = vadd.f32 0.0, %v435
      %v437 = vpop.f32.mrb[0].mxu0
      %v438 = vpop.f32.mrb[0].mxu0
      %v439 = vadd.f32 0.0, %v438
      %v440 = vpop.f32.mrb[0].mxu0
      %441 = vmatprep.mubr.bf16.mxu0 0
      %442 = vmatmul.mubr.bf16.gmra.mrb[0].mxu0 %v292
      %v443 = vpop.f32.mrb[0].mxu0
      %v444 = vadd.f32 0.0, %v443
      %v445 = vpop.f32.mrb[0].mxu0
      %v446 = vpop.f32.mrb[0].mxu0
      %v447 = vadd.f32 0.0, %v446
      %v448 = vpop.f32.mrb[0].mxu0
      %449 = vmatprep.mubr.bf16.mxu0 0
      %450 = vmatmul.mubr.bf16.gmra.mrb[0].mxu0 %v295
      %v451 = vpop.f32.mrb[0].mxu0
      %v452 = vadd.f32 0.0, %v451
      %v453 = vpop.f32.mrb[0].mxu0
      %v454 = vpop.f32.mrb[0].mxu0
      %v455 = vadd.f32 0.0, %v454
      %v456 = vpop.f32.mrb[0].mxu0
      %457 = vdwg.mxu0
      %v458 = vmax.f32 %v332, %v340
      %v459 = vmax.f32 %v335, %v343
      %v460 = vmax.f32 %v348, %v356
      %v461 = vmax.f32 %v351, %v359
      %v462 = vmax.f32 %v364, %v372
      %v463 = vmax.f32 %v367, %v375
      %v464 = vmax.f32 %v380, %v388
      %v465 = vmax.f32 %v383, %v391
      %v466 = vmax.f32 %v396, %v404
      %v467 = vmax.f32 %v399, %v407
      %v468 = vmax.f32 %v412, %v420
      %v469 = vmax.f32 %v415, %v423
      %v470 = vmax.f32 %v428, %v436
      %v471 = vmax.f32 %v431, %v439
      %v472 = vmax.f32 %v444, %v452
      %v473 = vmax.f32 %v447, %v455
      %vm474 = vcmask 162816
      %475 = vst.msk [vmem:[#allocation2] sm:$0xff] %vm474, %v458
      %476 = vst.msk [vmem:[#allocation2 + $0x8] sm:$0xff] %vm474, %v459
      %477 = vst.msk [vmem:[#allocation2 + $0x10] sm:$0xff] %vm474, %v460
      %478 = vst.msk [vmem:[#allocation2 + $0x18] sm:$0xff] %vm474, %v461
      %479 = vst.msk [vmem:[#allocation2 + $0x20] sm:$0xff] %vm474, %v462
      %480 = vst.msk [vmem:[#allocation2 + $0x28] sm:$0xff] %vm474, %v463
      %481 = vst.msk [vmem:[#allocation2 + $0x30] sm:$0xff] %vm474, %v464
      %482 = vst.msk [vmem:[#allocation2 + $0x38] sm:$0xff] %vm474, %v465
      %483 = vst.msk [vmem:[#allocation2 + $0x40] sm:$0xff] %vm474, %v466
      %484 = vst.msk [vmem:[#allocation2 + $0x48] sm:$0xff] %vm474, %v467
      %485 = vst.msk [vmem:[#allocation2 + $0x50] sm:$0xff] %vm474, %v468
      %486 = vst.msk [vmem:[#allocation2 + $0x58] sm:$0xff] %vm474, %v469
      %487 = vst.msk [vmem:[#allocation2 + $0x60] sm:$0xff] %vm474, %v470
      %488 = vst.msk [vmem:[#allocation2 + $0x68] sm:$0xff] %vm474, %v471
      %489 = vst.msk [vmem:[#allocation2 + $0x70] sm:$0xff] %vm474, %v472
      %490 = vst.msk [vmem:[#allocation2 + $0x78] sm:$0xff] %vm474, %v473
      %v491 = vld [vmem:[#allocation2] ss:$2 sm:$0xff]
      %s492 = scalar_lea.vmem [#allocation2], 16
      %v493 = vld [vmem:[%s492] ss:$2 sm:$0xff]
      %s494 = scalar_lea.vmem [#allocation2], 32
      %v495 = vld [vmem:[%s494] ss:$2 sm:$0xff]
      %s496 = scalar_lea.vmem [#allocation2], 48
      %v497 = vld [vmem:[%s496] ss:$2 sm:$0xff]
      %s498 = scalar_lea.vmem [#allocation2], 64
      %v499 = vld [vmem:[%s498] ss:$2 sm:$0xff]
      %s500 = scalar_lea.vmem [#allocation2], 80
      %v501 = vld [vmem:[%s500] ss:$2 sm:$0xff]
      %s502 = scalar_lea.vmem [#allocation2], 96
      %v503 = vld [vmem:[%s502] ss:$2 sm:$0xff]
      %s504 = scalar_lea.vmem [#allocation2], 112
      %v505 = vld [vmem:[%s504] ss:$2 sm:$0xff]
      %s506 = scalar_lea.vmem [#allocation2], 1
      %v507 = vld [vmem:[%s506] ss:$2 sm:$0xff]
      %s508 = scalar_lea.vmem [#allocation2], 17
      %v509 = vld [vmem:[%s508] ss:$2 sm:$0xff]
      %s510 = scalar_lea.vmem [#allocation2], 33
      %v511 = vld [vmem:[%s510] ss:$2 sm:$0xff]
      %s512 = scalar_lea.vmem [#allocation2], 49
      %v513 = vld [vmem:[%s512] ss:$2 sm:$0xff]
      %s514 = scalar_lea.vmem [#allocation2], 65
      %v515 = vld [vmem:[%s514] ss:$2 sm:$0xff]
      %s516 = scalar_lea.vmem [#allocation2], 81
      %v517 = vld [vmem:[%s516] ss:$2 sm:$0xff]
      %s518 = scalar_lea.vmem [#allocation2], 97
      %v519 = vld [vmem:[%s518] ss:$2 sm:$0xff]
      %s520 = scalar_lea.vmem [#allocation2], 113
      %v521 = vld [vmem:[%s520] ss:$2 sm:$0xff]
      %v522 = vmax.f32 %v491, %v507
      %v523 = vmax.f32 %v493, %v509
      %v524 = vmax.f32 %v495, %v511
      %v525 = vmax.f32 %v497, %v513
      %v526 = vmax.f32 %v499, %v515
      %v527 = vmax.f32 %v501, %v517
      %v528 = vmax.f32 %v503, %v519
      %v529 = vmax.f32 %v505, %v521
      %v530 = vpack.c.bf16 %v523, %v522
      %v531 = vpack.c.bf16 %v525, %v524
      %v532 = vpack.c.bf16 %v527, %v526
      %v533 = vpack.c.bf16 %v529, %v528
      %v538 = vunpack.c.l.b16 %v530
      %v539 = vunpack.c.h.b16 %v530
      %v540 = vunpack.c.l.b16 %v531
      %v541 = vunpack.c.h.b16 %v531
      %v542 = vunpack.c.l.b16 %v532
      %v543 = vunpack.c.h.b16 %v532
      %v544 = vunpack.c.l.b16 %v533
      %v545 = vunpack.c.h.b16 %v533
      %v546 = vpack.c.b16 %v538, %v538
      %v547 = vpack.c.b16 %v539, %v539
      %v548 = vpack.c.b16 %v540, %v540
      %v549 = vpack.c.b16 %v541, %v541
      %v550 = vpack.c.b16 %v542, %v542
      %v551 = vpack.c.b16 %v543, %v543
      %v552 = vpack.c.b16 %v544, %v544
      %v553 = vpack.c.b16 %v545, %v545
      %vm562 = vcmask 158720
      %563 = vst.msk [vmem:[%s181] sm:$0xf] %vm562, %v546
      %564 = vst.msk [vmem:[%s181 + $0x4] sm:$0xf] %vm562, %v547
      %565 = vst.msk [vmem:[%s181 + $0x8] sm:$0xf] %vm562, %v548
      %566 = vst.msk [vmem:[%s181 + $0xc] sm:$0xf] %vm562, %v549
      %567 = vst.msk [vmem:[%s181 + $0x10] sm:$0xf] %vm562, %v550
      %568 = vst.msk [vmem:[%s181 + $0x14] sm:$0xf] %vm562, %v551
      %569 = vst.msk [vmem:[%s181 + $0x18] sm:$0xf] %vm562, %v552
      %570 = vst.msk [vmem:[%s181 + $0x1c] sm:$0xf] %vm562, %v553
      %s571 = smul.u32 8, %s18
      %p572 = scmp.lt.s32.totalorder %s17, 1
      %s573 = scalar_select %p572, %s17, 1
      %p574 = scmp.lt.s32.totalorder %s571, 7
      %s575 = scalar_select %p574, %s571, 7
      %s576 = smul.addr %s573, 8
      %s577 = sadd.s32 %s575, %s576
      %s578 = smul.addr %s577, 4
      %s579 = scalar_lea.vmem %s2, %s578
      // Predicated region
      $region29: #{tpu_custom_call.1} parent=27 // pred_check
        %p580 = pneg %p94
      $region30: #{tpu_custom_call.1} parent=27 // pred_check_branch
        %582 = sbr.rel (%p580) target = $region32
      $region31: #{tpu_custom_call.1} parent=27 // pred_region
        %s583 = smul.u32 8, %s18
      $region32: #{tpu_custom_call.1} parent=27 // pred_fallthru
        _
    $region28: #{tpu_custom_call.1} parent=5 // pred_fallthru
      _
    %p584 = scmp.le.s32.totalorder 2, %s8
    // Predicated region
    $region33: #{tpu_custom_call.1} parent=5 // pred_check
      %p585 = pneg %p584
    $region34: #{tpu_custom_call.1} parent=5 // pred_check_branch
      %587 = sbr.rel (%p585) target = $region36
    $region35: #{tpu_custom_call.1} parent=5 // pred_region
      %s588 = ssub.s32 %s8, 2
      // Predicated region
      $region37: #{tpu_custom_call.1} parent=35 // pred_check
        %p589 = pneg %p100
      $region38: #{tpu_custom_call.1} parent=35 // pred_check_branch
        %591 = sbr.rel (%p589) target = $region40
      $region39: #{tpu_custom_call.1} parent=35 // pred_region
        %s592 = smul.u32 8, %s20
        %p593 = scmp.lt.s32.totalorder %s19, 1
        %s594 = scalar_select %p593, %s19, 1
        %p595 = scmp.lt.s32.totalorder %s592, 7
        %s596 = scalar_select %p595, %s592, 7
        %s597 = smul.addr %s594, 8
        %s598 = sadd.s32 %s596, %s597
        %s599 = smul.addr %s598, 4
        %s600 = scalar_lea.vmem %s2, %s599
      $region40: #{tpu_custom_call.1} parent=35 // pred_fallthru
        _
    $region36: #{tpu_custom_call.1} parent=5 // pred_fallthru
      _
  $region6: #{tpu_custom_call.1} parent=0 // loop_footer
    %s12 = sadd.s32 1, %s8
  $region7: #{tpu_custom_call.1} parent=0 // loop_footer_branch
    %7 = sbr.rel target = $region3
  $region8: #{tpu_custom_call.1} parent=0 // loop_exit
    _

</llo_original>
